<compile_context>
chip_gen: v6e
topology: v6e:2x2x1
jax: 0.10.0
libtpu: 0.0.40
codegen_flags: <defaults>
</compile_context>

<pallas_src>
import functools

import jax
import jax.numpy as jnp
from jax.experimental import pallas as pl
from jax.experimental.pallas import tpu as pltpu

LANE = 128
SUBLANE = 8


def _round_up(x, m):
    return (x + m - 1) // m * m


def _vmem_limit_bytes():
    """Per-generation scoped-VMEM limit: 3/4 of physical VMEM.

    v7x: 64 MiB physical -> 48 MiB limit; v5e/v6e: 128 MiB -> 96 MiB.
    Falls back to the conservative v7x value if the HW query is unavailable.
    """
    phys = 64 * 1024 * 1024
    try:
        info = pltpu.get_tpu_info()
        phys = int(getattr(info, "vmem_capacity_bytes", phys))
    except Exception:
        pass
    return (3 * phys) // 4


def _recognition_kernel(n_hidden, *refs):
    """One batch tile of the MLP trunk + fused heads, fully in VMEM.

    refs layout:
      x_ref (TM, D_in)  f32,
      (w_ref (in_pad, out_pad) param-dtype, b_ref (1, out_pad) f32) * n_hidden,
      w_head (H_pad, OUT_PAD) param-dtype, b_head (1, OUT_PAD) f32,
      out_ref (TM, OUT_PAD) out-dtype
    """
    x_ref = refs[0]
    idx = 1
    h = x_ref[...]                                   # f32 activations
    for _ in range(n_hidden):
        w_ref, b_ref = refs[idx], refs[idx + 1]
        idx += 2
        # Cast for the MXU only when weights are narrower than f32; the cast is
        # VPU filler hidden under the matmul.  f32 path: no-op.
        lhs = h if h.dtype == w_ref.dtype else h.astype(w_ref.dtype)
        h = jnp.dot(lhs, w_ref[...], preferred_element_type=jnp.float32)
        h = jnp.maximum(h + b_ref[...], 0.0)         # f32 bias + ReLU (== clamp(min=0))
    w_head, b_head, out_ref = refs[idx], refs[idx + 1], refs[idx + 2]
    lhs = h if h.dtype == w_head.dtype else h.astype(w_head.dtype)
    out_ref[...] = (
        jnp.dot(lhs, w_head[...], preferred_element_type=jnp.float32) + b_head[...]
    ).astype(out_ref.dtype)


def prepare_params(hidden_params, logvar_params, logprod_params, dtype=jnp.float32):
    """One-time parameter preparation (NOT in the per-call hot path).

    - Transposes each Linear weight from PyTorch (out, in) to (in, out).
    - Zero-pads hidden widths and the fused head width to multiples of 128.
    - Fuses logVariable / logProductions into one (H_pad, OUT_PAD) weight.
    - Weights stored in `dtype` (use f32 on v5e); biases always f32.
    """
    args = []
    layer_pads = []
    if hidden_params:
        prev_dim = hidden_params[0][0].shape[1]
    else:
        prev_dim = logvar_params[0].shape[1]
    prev_pad = prev_dim                              # features arrive un-padded

    for W, b in hidden_params:
        out_d, in_d = W.shape
        assert in_d == prev_dim
        o_pad = _round_up(out_d, LANE)
        Wp = jnp.zeros((prev_pad, o_pad), dtype).at[:in_d, :out_d].set(W.T.astype(dtype))
        bp = jnp.zeros((1, o_pad), jnp.float32).at[0, :out_d].set(b.astype(jnp.float32))
        args += [Wp, bp]
        layer_pads.append(o_pad)
        prev_dim, prev_pad = out_d, o_pad

    Wv, bv = logvar_params
    Wpr, bpr = logprod_params
    n_prod = Wpr.shape[0]
    fused = 1 + n_prod
    out_pad = _round_up(fused, LANE)
    Wh = jnp.zeros((prev_pad, out_pad), dtype)
    Wh = Wh.at[:prev_dim, 0:1].set(Wv.T.astype(dtype))
    Wh = Wh.at[:prev_dim, 1:fused].set(Wpr.T.astype(dtype))
    bh = jnp.zeros((1, out_pad), jnp.float32)
    bh = bh.at[0, 0].set(bv.astype(jnp.float32)[0])
    bh = bh.at[0, 1:fused].set(bpr.astype(jnp.float32))
    args += [Wh, bh]
    layer_pads.append(out_pad)

    return {
        "args": tuple(args),
        "n_hidden": len(hidden_params),
        "n_prod": n_prod,
        "out_pad": out_pad,
        "layer_pads": tuple(layer_pads),
        "param_dtype": jnp.dtype(dtype),
    }


def recognition_forward(features, prepped, block_rows=512, out_dtype=jnp.float32):
    """features: (B, D_in) f32.  prepped: output of prepare_params().

    Returns (logVariable (B, 1), logProductions (B, G)) in `out_dtype`
    (use bf16 to halve the HBM store when downstream tolerates it).
    """
    args = prepped["args"]
    n_hidden = prepped["n_hidden"]
    n_prod = prepped["n_prod"]
    out_pad = prepped["out_pad"]
    layer_pads = prepped["layer_pads"]
    param_dtype = prepped["param_dtype"]

    B, d_in = features.shape
    out_dtype = jnp.dtype(out_dtype)

    # Sub-32-bit tiles pack 2 rows/sublane: round the batch tile to 16 when any
    # narrow dtype is involved so bf16 tiles land on native sublane packing.
    narrow = param_dtype.itemsize < 4 or out_dtype.itemsize < 4
    sub = 16 if narrow else SUBLANE

    param_bytes = sum(int(a.size) * a.dtype.itemsize for a in args)
    feat_item = features.dtype.itemsize
    out_item = out_dtype.itemsize

    vmem_limit = _vmem_limit_bytes()
    budget = int(vmem_limit * 0.8)       # headroom for compiler scratch / pipeline state

    def vmem_need(t):
        need = 2 * param_bytes                               # param blocks double-buffer too
        need += 2 * t * d_in * feat_item                     # feature tile, double-buffered
        need += 2 * t * out_pad * out_item                   # output tile, double-buffered
        need += 2 * sum(t * w * 4 for w in layer_pads)       # f32 intermediates (+ cast copies)
        return need

    if B <= sub:
        tm = B                                               # block == full array dim
    else:
        tm = min(_round_up(B, sub), block_rows)
        # Guarantee >= 2 grid steps so v7x's two TensorCores both get work.
        tm = min(tm, _round_up(-(-B // 2), sub))
        while tm > sub and vmem_need(tm) > budget:
            tm = max(sub, _round_up(tm // 2, sub))

    grid = (pl.cdiv(B, tm),)

    in_specs = [pl.BlockSpec((tm, d_in), lambda i: (i, 0))]
    for a in args:
        # Parameters: full-array blocks, same block every grid step (VMEM resident;
        # never re-fetched, but their double-buffer is accounted for in vmem_need).
        in_specs.append(pl.BlockSpec(a.shape, lambda i: (0, 0)))
    out_spec = pl.BlockSpec((tm, out_pad), lambda i: (i, 0))   # lane-dense (128) store

    out = pl.pallas_call(
        functools.partial(_recognition_kernel, n_hidden),
        out_shape=jax.ShapeDtypeStruct((B, out_pad), out_dtype),
        grid=grid,
        in_specs=in_specs,
        out_specs=out_spec,
        compiler_params=pltpu.CompilerParams(
            dimension_semantics=("parallel",),   # batch axis shards across TCs on v7x
            vmem_limit_bytes=vmem_limit,
        ),
    )(features, *args)

    # Read the padded buffer back ONCE as the useful (B, 1 + n_prod) slab, then split.
    fused = out[:, : 1 + n_prod]
    return fused[:, :1], fused[:, 1:]


def _reference_forward(features, hidden_params, logvar_params, logprod_params):
    h = features
    for W, b in hidden_params:
        h = jnp.maximum(h @ W.T + b, 0.0)
    Wv, bv = logvar_params
    Wp, bp = logprod_params
    return h @ Wv.T + bv, h @ Wp.T + bp


if __name__ == "__main__":
    # Module-consistent small shapes:
    #   featureExtractor.outputDimensionality = 32, hidden = [64], len(grammar) = 10
    B, D_IN, HIDDEN, G = 24, 32, 64, 10

    key = jax.random.PRNGKey(0)
    k_x, k_w1, k_b1, k_wv, k_bv, k_wp, k_bp = jax.random.split(key, 7)

    features = jax.random.normal(k_x, (B, D_IN), dtype=jnp.float32)

    def init_linear(kw, kb, out_dim, in_dim):
        bound = 1.0 / jnp.sqrt(jnp.float32(in_dim))
        W = jax.random.uniform(kw, (out_dim, in_dim), jnp.float32, -bound, bound)
        b = jax.random.uniform(kb, (out_dim,), jnp.float32, -bound, bound)
        return W, b

    hidden_params = [init_linear(k_w1, k_b1, HIDDEN, D_IN)]
    logvar_params = init_linear(k_wv, k_bv, 1, HIDDEN)
    logprod_params = init_linear(k_wp, k_bp, G, HIDDEN)

    ref_var, ref_prod = _reference_forward(
        features, hidden_params, logvar_params, logprod_params
    )

    # ---- f32 params, f32 output (default path; 2-step grid for v7x megacore) ----
    prepped_f32 = prepare_params(hidden_params, logvar_params, logprod_params,
                                 dtype=jnp.float32)
    log_var, log_prod = recognition_forward(features, prepped_f32)
    jax.block_until_ready((log_var, log_prod))
    assert log_var.shape == (B, 1) and log_prod.shape == (B, G)
    assert jnp.allclose(log_var, ref_var, atol=1e-4, rtol=1e-4)
    assert jnp.allclose(log_prod, ref_prod, atol=1e-4, rtol=1e-4)

    # ---- f32 path, forced small tiles (exercises multi-step DMA pipelining) ----
    log_var2, log_prod2 = recognition_forward(features, prepped_f32, block_rows=8)
    jax.block_until_ready((log_var2, log_prod2))
    assert jnp.allclose(log_var2, ref_var, atol=1e-4, rtol=1e-4)
    assert jnp.allclose(log_prod2, ref_prod, atol=1e-4, rtol=1e-4)

    # ---- bf16 weights + bf16 output (halves the HBM store; recommended v6e/v7x) ----
    prepped_bf16 = prepare_params(hidden_params, logvar_params, logprod_params,
                                  dtype=jnp.bfloat16)
    log_var_b, log_prod_b = recognition_forward(features, prepped_bf16,
                                                out_dtype=jnp.bfloat16)
    jax.block_until_ready((log_var_b, log_prod_b))
    assert jnp.allclose(log_var_b.astype(jnp.float32), ref_var, atol=1e-1, rtol=1e-1)
    assert jnp.allclose(log_prod_b.astype(jnp.float32), ref_prod, atol=1e-1, rtol=1e-1)

    print("KERNEL_OK")
</pallas_src>

<mosaic_0001>
module attributes {stable_mosaic.version = 11 : i64} {
  func.func @_recognition_kernel(%arg0: i32, %arg1: memref<16x32xf32, #tpu.memory_space<vmem>>, %arg2: memref<32x128xf32, #tpu.memory_space<vmem>>, %arg3: memref<1x128xf32, #tpu.memory_space<vmem>>, %arg4: memref<128x128xf32, #tpu.memory_space<vmem>>, %arg5: memref<1x128xf32, #tpu.memory_space<vmem>>, %arg6: memref<16x128xf32, #tpu.memory_space<vmem>>) attributes {dimension_semantics = [#tpu.dimension_semantics<parallel>], iteration_bounds = array<i64: 2>, scalar_prefetch = 0 : i64, scratch_operands = 0 : i64, tpu.core_type = #tpu.core_type<tc>, window_params = [{transform_indices = @transform_0, window_bounds = array<i64: 16, 32>}, {pipeline_mode = #tpu.pipeline_mode<synchronous>, transform_indices = @transform_1, window_bounds = array<i64: 32, 128>}, {pipeline_mode = #tpu.pipeline_mode<synchronous>, transform_indices = @transform_2, window_bounds = array<i64: 1, 128>}, {pipeline_mode = #tpu.pipeline_mode<synchronous>, transform_indices = @transform_3, window_bounds = array<i64: 128, 128>}, {pipeline_mode = #tpu.pipeline_mode<synchronous>, transform_indices = @transform_4, window_bounds = array<i64: 1, 128>}, {transform_indices = @transform_5, window_bounds = array<i64: 16, 128>}]} {
    %c0 = arith.constant 0 : index
    %c0_0 = arith.constant 0 : index
    %0 = vector.load %arg1[%c0, %c0_0] : memref<16x32xf32, #tpu.memory_space<vmem>>, vector<16x32xf32>
    %c0_1 = arith.constant 0 : index
    %c0_2 = arith.constant 0 : index
    %1 = vector.load %arg2[%c0_1, %c0_2] : memref<32x128xf32, #tpu.memory_space<vmem>>, vector<32x128xf32>
    %cst = arith.constant dense<0.000000e+00> : vector<16x128xf32>
    %2 = tpu.matmul %0, %1, %cst {dimension_numbers = #tpu.dot_dimension_numbers<[1], [0], [0], [1], [0, 0, 1, 1], [], []>} : vector<16x32xf32>, vector<32x128xf32>, vector<16x128xf32> -> vector<16x128xf32>
    %c0_3 = arith.constant 0 : index
    %c0_4 = arith.constant 0 : index
    %3 = vector.load %arg3[%c0_3, %c0_4] : memref<1x128xf32, #tpu.memory_space<vmem>>, vector<1x128xf32>
    %4 = vector.broadcast %3 : vector<1x128xf32> to vector<16x128xf32>
    %5 = arith.addf %2, %4 : vector<16x128xf32>
    %cst_5 = arith.constant 0.000000e+00 : f32
    %6 = vector.broadcast %cst_5 : f32 to vector<16x128xf32>
    %7 = arith.maximumf %5, %6 : vector<16x128xf32>
    %c0_6 = arith.constant 0 : index
    %c0_7 = arith.constant 0 : index
    %8 = vector.load %arg4[%c0_6, %c0_7] : memref<128x128xf32, #tpu.memory_space<vmem>>, vector<128x128xf32>
    %cst_8 = arith.constant dense<0.000000e+00> : vector<16x128xf32>
    %9 = tpu.matmul %7, %8, %cst_8 {dimension_numbers = #tpu.dot_dimension_numbers<[1], [0], [0], [1], [0, 0, 1, 1], [], []>} : vector<16x128xf32>, vector<128x128xf32>, vector<16x128xf32> -> vector<16x128xf32>
    %c0_9 = arith.constant 0 : index
    %c0_10 = arith.constant 0 : index
    %10 = vector.load %arg5[%c0_9, %c0_10] : memref<1x128xf32, #tpu.memory_space<vmem>>, vector<1x128xf32>
    %11 = vector.broadcast %10 : vector<1x128xf32> to vector<16x128xf32>
    %12 = arith.addf %9, %11 : vector<16x128xf32>
    %c0_11 = arith.constant 0 : index
    %c0_12 = arith.constant 0 : index
    %13 = vector.load %arg6[%c0_11, %c0_12] : memref<16x128xf32, #tpu.memory_space<vmem>>, vector<16x128xf32>
    tpu.vector_store %arg6[%c0_11, %c0_12], %12 {strides = array<i32>} : memref<16x128xf32, #tpu.memory_space<vmem>>, vector<16x128xf32>,
    return
  }
  func.func @transform_0(%arg0: i32) -> (i32, i32) {
    %c0_i32 = arith.constant 0 : i32
    %c0_i32_0 = arith.constant 0 : i32
    return %arg0, %c0_i32 : i32, i32
  }
  func.func @transform_1(%arg0: i32) -> (i32, i32) {
    %c0_i32 = arith.constant 0 : i32
    %c0_i32_0 = arith.constant 0 : i32
    %c0_i32_1 = arith.constant 0 : i32
    return %c0_i32, %c0_i32_0 : i32, i32
  }
  func.func @transform_2(%arg0: i32) -> (i32, i32) {
    %c0_i32 = arith.constant 0 : i32
    %c0_i32_0 = arith.constant 0 : i32
    %c0_i32_1 = arith.constant 0 : i32
    return %c0_i32, %c0_i32_0 : i32, i32
  }
  func.func @transform_3(%arg0: i32) -> (i32, i32) {
    %c0_i32 = arith.constant 0 : i32
    %c0_i32_0 = arith.constant 0 : i32
    %c0_i32_1 = arith.constant 0 : i32
    return %c0_i32, %c0_i32_0 : i32, i32
  }
  func.func @transform_4(%arg0: i32) -> (i32, i32) {
    %c0_i32 = arith.constant 0 : i32
    %c0_i32_0 = arith.constant 0 : i32
    %c0_i32_1 = arith.constant 0 : i32
    return %c0_i32, %c0_i32_0 : i32, i32
  }
  func.func @transform_5(%arg0: i32) -> (i32, i32) {
    %c0_i32 = arith.constant 0 : i32
    %c0_i32_0 = arith.constant 0 : i32
    return %arg0, %c0_i32 : i32, i32
  }
}

</mosaic_0001>

<llo_original>
// kernel: tpu_custom_call.1
$region0: #{tpu_custom_call.1}
  #allocation0 [shape = 'u32[]', space=smem, size = 0x4, offset = 0x4, fixed_abs, tag = 'smem constant byte address 0x4 - core index']
  #allocation1 [shape = 'u32[144,128]{1,0:T(1,128)}', space=vmem, size = 0x12000, scoped, tag = 'internal scratch']
  %s0 = inlined_call_operand.hbm [shape: f32[24,32], index: 0, kind: input, shape index: {}]
  %s1 = inlined_call_operand.hbm [shape: f32[32,128], index: 1, kind: input, shape index: {}]
  %s2 = inlined_call_operand.vmem [shape: f32[1,128], index: 2, kind: input, shape index: {}]
  %s3 = inlined_call_operand.hbm [shape: f32[128,128], index: 3, kind: input, shape index: {}]
  %s4 = inlined_call_operand.vmem [shape: f32[1,128], index: 4, kind: input, shape index: {}]
  %s5 = inlined_call_operand.hbm [shape: f32[24,128], index: 5, kind: output, shape index: {}]
  %s6 = sld [smem:[#allocation0]]
  $region65: #{tpu_custom_call.1} parent=0
    _
  %s8 = ssub.s32 1, %s6
  %s9 = scalar_select 0, %s8, %s6
  $region1: #{tpu_custom_call.1} parent=0
    #allocation2 [shape = 'u8[16384]{0}', space=vmem, size = 0x4000, scoped, tag = 'input window, operand 0']
    #allocation3 [shape = 's32[2]{0}', space=sflag, size = 0x8, scoped, tag = 'scoped memory for tpu_custom_call.1']
    #allocation4 [shape = 's32[2]{0}', space=sflag, size = 0x8, scoped, tag = 'scoped memory for tpu_custom_call.1']
    #allocation5 [shape = 'u8[16384]{0}', space=vmem, size = 0x4000, scoped, tag = 'input window, operand 1, single buffered']
    #allocation6 [shape = 's32[1]{0}', space=sflag, size = 0x4, scoped, tag = 'scoped memory for tpu_custom_call.1']
    #allocation7 [shape = 'u8[65536]{0}', space=vmem, size = 0x10000, scoped, tag = 'input window, operand 3, single buffered']
    #allocation8 [shape = 'u8[16384]{0}', space=vmem, size = 0x4000, scoped, tag = 'output window, operand 0']
    %10 = vsyncpa [#allocation3], 0
    %s11 = scalar_lea.sflag [#allocation3], 1
    %12 = vsyncpa %s11, 0
    %13 = vsyncpa [#allocation6], 0
    %14 = vsyncpa [#allocation4], 0
    %s15 = scalar_lea.sflag [#allocation4], 1
    %16 = vsyncpa %s15, 0
    loop: start=0, step=1, limit=4
    $region2: #{tpu_custom_call.1} parent=1 // loop_pre_header
      _
    $region3: #{tpu_custom_call.1} parent=1 // loop_header
      %s18 = sphi 0, %s22
      %p19 = scmp.ge.s32.totalorder %s18, 4
      %s28 = sphi 0, %s30
      %s31 = sphi 0, %s28
      %s32 = sphi 0, %s31
      %s48 = sphi 0, %s32
      %s52 = sphi 0, %s52
      %s54 = sphi 0, %s52
      %s55 = sphi 0, %s54
      %s69 = sphi 0, %s55
      %s73 = sphi 0, %s73
      %s75 = sphi 0, %s73
      %s76 = sphi 0, %s75
      %s90 = sphi 0, %s76
      %s94 = sphi 0, %s94
      %s96 = sphi 0, %s94
      %s97 = sphi 0, %s96
      %s111 = sphi 0, %s97
      %s115 = sphi 0, %s115
      %s117 = sphi 0, %s115
      %s118 = sphi 0, %s117
      %s132 = sphi 0, %s118
      %s138 = sphi 0, %s140
      %s141 = sphi 0, %s138
      %s142 = sphi 0, %s141
      %s158 = sphi 0, %s142
    $region4: #{tpu_custom_call.1} parent=1 // loop_header_branch
      %21 = sbr.rel (%p19) target = $region8
    $region5: #{tpu_custom_call.1} parent=1 // loop_body
      %s23 = ssub.s32 %s18, 1
      %s24 = ssub.s32 %s18, 2
      %s25 = sadd.s32 %s18, 1
      %s26 = ssub.s32 %s18, %s25
      %p27 = scmp.eq.s32.totalorder %s26, 0
      %s29 = sadd.s32 %s28, 1
      %s30 = scalar_select %p27, %s28, %s29
      %p33 = pneg %p27
      %p34 = scmp.eq.s32.totalorder %s18, 1
      %p35 = por %p33, %p34
      %p36 = scmp.ne.s32.totalorder %s28, %s31
      %p37 = scmp.eq.s32.totalorder %s18, 0
      %p38 = por %p36, %p37
      %p39 = scmp.ne.s32.totalorder %s28, %s31
      %p40 = scmp.eq.s32.totalorder %s23, 1
      %p41 = por %p39, %p40
      %p42 = scmp.ne.s32.totalorder %s31, %s32
      %p43 = scmp.eq.s32.totalorder %s23, 0
      %p44 = por %p42, %p43
      %p45 = scmp.ne.s32.totalorder %s31, %s32
      %p46 = scmp.eq.s32.totalorder %s24, 1
      %p47 = por %p45, %p46
      %p49 = scmp.ne.s32.totalorder %s32, %s48
      %p50 = scmp.eq.s32.totalorder %s24, 0
      %p51 = por %p49, %p50
      %s53 = sadd.s32 %s52, 1
      %p56 = scmp.eq.s32.totalorder %s18, 1
      %p57 = scmp.ne.s32.totalorder %s52, %s54
      %p58 = scmp.eq.s32.totalorder %s18, 0
      %p59 = por %p57, %p58
      %p60 = scmp.ne.s32.totalorder %s52, %s54
      %p61 = scmp.eq.s32.totalorder %s23, 1
      %p62 = por %p60, %p61
      %p63 = scmp.ne.s32.totalorder %s54, %s55
      %p64 = scmp.eq.s32.totalorder %s23, 0
      %p65 = por %p63, %p64
      %p66 = scmp.ne.s32.totalorder %s54, %s55
      %p67 = scmp.eq.s32.totalorder %s24, 1
      %p68 = por %p66, %p67
      %p70 = scmp.ne.s32.totalorder %s55, %s69
      %p71 = scmp.eq.s32.totalorder %s24, 0
      %p72 = por %p70, %p71
      %s74 = sadd.s32 %s73, 1
      %p77 = scmp.eq.s32.totalorder %s18, 1
      %p78 = scmp.ne.s32.totalorder %s73, %s75
      %p79 = scmp.eq.s32.totalorder %s18, 0
      %p80 = por %p78, %p79
      %p81 = scmp.ne.s32.totalorder %s73, %s75
      %p82 = scmp.eq.s32.totalorder %s23, 1
      %p83 = por %p81, %p82
      %p84 = scmp.ne.s32.totalorder %s75, %s76
      %p85 = scmp.eq.s32.totalorder %s23, 0
      %p86 = por %p84, %p85
      %p87 = scmp.ne.s32.totalorder %s75, %s76
      %p88 = scmp.eq.s32.totalorder %s24, 1
      %p89 = por %p87, %p88
      %p91 = scmp.ne.s32.totalorder %s76, %s90
      %p92 = scmp.eq.s32.totalorder %s24, 0
      %p93 = por %p91, %p92
      %s95 = sadd.s32 %s94, 1
      %p98 = scmp.eq.s32.totalorder %s18, 1
      %p99 = scmp.ne.s32.totalorder %s94, %s96
      %p100 = scmp.eq.s32.totalorder %s18, 0
      %p101 = por %p99, %p100
      %p102 = scmp.ne.s32.totalorder %s94, %s96
      %p103 = scmp.eq.s32.totalorder %s23, 1
      %p104 = por %p102, %p103
      %p105 = scmp.ne.s32.totalorder %s96, %s97
      %p106 = scmp.eq.s32.totalorder %s23, 0
      %p107 = por %p105, %p106
      %p108 = scmp.ne.s32.totalorder %s96, %s97
      %p109 = scmp.eq.s32.totalorder %s24, 1
      %p110 = por %p108, %p109
      %p112 = scmp.ne.s32.totalorder %s97, %s111
      %p113 = scmp.eq.s32.totalorder %s24, 0
      %p114 = por %p112, %p113
      %s116 = sadd.s32 %s115, 1
      %p119 = scmp.eq.s32.totalorder %s18, 1
      %p120 = scmp.ne.s32.totalorder %s115, %s117
      %p121 = scmp.eq.s32.totalorder %s18, 0
      %p122 = por %p120, %p121
      %p123 = scmp.ne.s32.totalorder %s115, %s117
      %p124 = scmp.eq.s32.totalorder %s23, 1
      %p125 = por %p123, %p124
      %p126 = scmp.ne.s32.totalorder %s117, %s118
      %p127 = scmp.eq.s32.totalorder %s23, 0
      %p128 = por %p126, %p127
      %p129 = scmp.ne.s32.totalorder %s117, %s118
      %p130 = scmp.eq.s32.totalorder %s24, 1
      %p131 = por %p129, %p130
      %p133 = scmp.ne.s32.totalorder %s118, %s132
      %p134 = scmp.eq.s32.totalorder %s24, 0
      %p135 = por %p133, %p134
      %s136 = ssub.s32 %s18, %s25
      %p137 = scmp.eq.s32.totalorder %s136, 0
      %s139 = sadd.s32 %s138, 1
      %s140 = scalar_select %p137, %s138, %s139
      %p143 = pneg %p137
      %p144 = scmp.eq.s32.totalorder %s18, 1
      %p145 = por %p143, %p144
      %p146 = scmp.ne.s32.totalorder %s138, %s141
      %p147 = scmp.eq.s32.totalorder %s18, 0
      %p148 = por %p146, %p147
      %p149 = scmp.ne.s32.totalorder %s138, %s141
      %p150 = scmp.eq.s32.totalorder %s23, 1
      %p151 = por %p149, %p150
      %p152 = scmp.ne.s32.totalorder %s141, %s142
      %p153 = scmp.eq.s32.totalorder %s23, 0
      %p154 = por %p152, %p153
      %p155 = scmp.ne.s32.totalorder %s141, %s142
      %p156 = scmp.eq.s32.totalorder %s24, 1
      %p157 = por %p155, %p156
      %p159 = scmp.ne.s32.totalorder %s142, %s158
      %p160 = scmp.eq.s32.totalorder %s24, 0
      %p161 = por %p159, %p160
      %p162 = scmp.le.s32.totalorder 1, %s18
      %p163 = scmp.lt.s32.totalorder %s18, 3
      %p164 = pnand %p162, %p163
      %p165 = pneg %p164
      // Predicated region
      $region9: #{tpu_custom_call.1} parent=5 // pred_check
        _
      $region10: #{tpu_custom_call.1} parent=5 // pred_check_branch
        %167 = sbr.rel (%p164) target = $region12
      $region11: #{tpu_custom_call.1} parent=5 // pred_region
        %s168 = ssub.s32 %s18, 1
        // Predicated region
        $region13: #{tpu_custom_call.1} parent=11 // pred_check
          %p169 = pneg %p65
        $region14: #{tpu_custom_call.1} parent=11 // pred_check_branch
          %171 = sbr.rel (%p169) target = $region16
        $region15: #{tpu_custom_call.1} parent=11 // pred_region
          %s173 = ssub.s32 512, 512
          %174 = vsyncadd [#allocation6], %s173
          %s175 = sshll.u32 [#allocation5], 4
          %s176 = int_to_ptr.vmem [resolvable:$true] %s175
          %181 = dma.hbm_to_vmem [thread:$0]  %s1, 512, %s176, [#allocation6], 128, 128, 8
        $region16: #{tpu_custom_call.1} parent=11 // pred_fallthru
          _
        // Predicated region
        $region17: #{tpu_custom_call.1} parent=11 // pred_check
          %p182 = pneg %p86
        $region18: #{tpu_custom_call.1} parent=11 // pred_check_branch
          %184 = sbr.rel (%p182) target = $region20
        $region19: #{tpu_custom_call.1} parent=11 // pred_region
          _
        $region20: #{tpu_custom_call.1} parent=11 // pred_fallthru
          _
        // Predicated region
        $region21: #{tpu_custom_call.1} parent=11 // pred_check
          %p185 = pneg %p107
        $region22: #{tpu_custom_call.1} parent=11 // pred_check_branch
          %187 = sbr.rel (%p185) target = $region24
        $region23: #{tpu_custom_call.1} parent=11 // pred_region
          %s189 = ssub.s32 2048, 2048
          %190 = vsyncadd [#allocation6], %s189
          %s191 = sshll.u32 [#allocation7], 4
          %s192 = int_to_ptr.vmem [resolvable:$true] %s191
          %197 = dma.hbm_to_vmem [thread:$0]  %s3, 2048, %s192, [#allocation6], 128, 128, 8
        $region24: #{tpu_custom_call.1} parent=11 // pred_fallthru
          _
        // Predicated region
        $region25: #{tpu_custom_call.1} parent=11 // pred_check
          %p198 = pneg %p128
        $region26: #{tpu_custom_call.1} parent=11 // pred_check_branch
          %200 = sbr.rel (%p198) target = $region28
        $region27: #{tpu_custom_call.1} parent=11 // pred_region
          _
        $region28: #{tpu_custom_call.1} parent=11 // pred_fallthru
          _
      $region12: #{tpu_custom_call.1} parent=5 // pred_fallthru
        _
      %p201 = scmp.lt.s32.totalorder %s18, 2
      // Predicated region
      $region29: #{tpu_custom_call.1} parent=5 // pred_check
        %p202 = pneg %p201
      $region30: #{tpu_custom_call.1} parent=5 // pred_check_branch
        %204 = sbr.rel (%p202) target = $region32
      $region31: #{tpu_custom_call.1} parent=5 // pred_region
        // Predicated region
        $region33: #{tpu_custom_call.1} parent=31 // pred_check
          %p205 = pneg %p38
        $region34: #{tpu_custom_call.1} parent=31 // pred_check_branch
          %207 = sbr.rel (%p205) target = $region36
        $region35: #{tpu_custom_call.1} parent=31 // pred_region
          %s208 = sand.u32 %s28, 1
          %s209 = scalar_lea.sflag [#allocation3], %s208
          %s210 = sand.u32 %s28, 1
          %s211 = smul.addr %s210, 16
          %s212 = scalar_lea.vmem [#allocation2], %s211
          %s213 = smul.u32 2, %s18
          %s214 = ssub.s32 3, %s213
          %p215 = scmp.lt.s32.totalorder %s214, 2
          %s216 = scalar_select %p215, %s214, 2
          %s217 = smul.u32 128, %s216
          %s219 = ssub.s32 256, %s217
          %220 = vsyncadd %s209, %s219
          %p221 = scmp.ne.s32.totalorder 0, %s217
          %s222 = smul.addr %s213, 128
          %s223 = scalar_lea.hbm %s0, %s222
          %s224 = smul.u32 8, %s216
          %s225 = sshll.u32 %s212, 4
          %s226 = int_to_ptr.vmem [resolvable:$true] %s225
          %s227 = sshll.u32 %s224, 4
          %231 = dma.hbm_to_vmem [thread:$0]  (%p221), %s223, %s227, %s226, %s209, 128, 128, 8
        $region36: #{tpu_custom_call.1} parent=31 // pred_fallthru
          _
      $region32: #{tpu_custom_call.1} parent=5 // pred_fallthru
        _
      %p232 = scmp.le.s32.totalorder 1, %s18
      %p233 = scmp.lt.s32.totalorder %s18, 3
      %p234 = pnand %p232, %p233
      %p235 = pneg %p234
      // Predicated region
      $region37: #{tpu_custom_call.1} parent=5 // pred_check
        _
      $region38: #{tpu_custom_call.1} parent=5 // pred_check_branch
        %237 = sbr.rel (%p234) target = $region40
      $region39: #{tpu_custom_call.1} parent=5 // pred_region
        %s238 = ssub.s32 %s18, 1
        %s239 = sand.u32 %s31, 1
        %s240 = scalar_lea.sflag [#allocation3], %s239
        %s241 = sand.u32 %s31, 1
        %s242 = smul.addr %s241, 16
        %s243 = scalar_lea.vmem [#allocation2], %s242
        // Predicated region
        $region41: #{tpu_custom_call.1} parent=39 // pred_check
          %p244 = pneg %p44
        $region42: #{tpu_custom_call.1} parent=39 // pred_check_branch
          %246 = sbr.rel (%p244) target = $region44
        $region43: #{tpu_custom_call.1} parent=39 // pred_region
          %247 = dma.done %s240, 256
        $region44: #{tpu_custom_call.1} parent=39 // pred_fallthru
          _
        // Predicated region
        $region45: #{tpu_custom_call.1} parent=39 // pred_check
          %p248 = pneg %p65
        $region46: #{tpu_custom_call.1} parent=39 // pred_check_branch
          %250 = sbr.rel (%p248) target = $region48
        $region47: #{tpu_custom_call.1} parent=39 // pred_region
          %251 = dma.done [#allocation6], 512
        $region48: #{tpu_custom_call.1} parent=39 // pred_fallthru
          _
        // Predicated region
        $region49: #{tpu_custom_call.1} parent=39 // pred_check
          %p252 = pneg %p107
        $region50: #{tpu_custom_call.1} parent=39 // pred_check_branch
          %254 = sbr.rel (%p252) target = $region52
        $region51: #{tpu_custom_call.1} parent=39 // pred_region
          %255 = dma.done [#allocation6], 2048
        $region52: #{tpu_custom_call.1} parent=39 // pred_fallthru
          _
        %s256 = sand.u32 %s31, 1
        %s257 = scalar_lea.sflag [#allocation3], %s256
        %s258 = sand.u32 %s31, 1
        %s259 = smul.addr %s258, 16
        %s260 = scalar_lea.vmem [#allocation2], %s259
        %p261 = pneg %p44
        %p262 = pneg %p41
        %p263 = pneg %p65
        %p264 = pneg %p62
        %p265 = pneg %p86
        %p266 = pneg %p83
        %p267 = pneg %p107
        %p268 = pneg %p104
        %p269 = pneg %p128
        %p270 = pneg %p125
        %p271 = pneg %p154
        %p272 = pneg %p151
        %s273 = sand.u32 %s141, 1
        %s274 = scalar_lea.sflag [#allocation4], %s273
        %s275 = sand.u32 %s141, 1
        %s276 = smul.addr %s275, 16
        %s277 = scalar_lea.vmem [#allocation8], %s276
        %s278 = smul.u32 2, %s23
        %s279 = ssub.s32 3, %s278
        %p280 = scmp.lt.s32.totalorder %s279, 2
        %s281 = scalar_select %p280, %s279, 2
        %s282 = smul.u32 128, %s281
        %s283 = smul.u32 2, %s23
        %s284 = ssub.s32 3, %s283
        %p285 = scmp.lt.s32.totalorder %s284, 2
        %s286 = scalar_select %p285, %s284, 2
        %s287 = smul.u32 128, %s286
        %v288 = vld [vmem:[%s243] sm:$0xff]
        %v289 = vld [vmem:[%s243 + $0x8] sm:$0xff]
        %v290 = vld [vmem:[#allocation5] sm:$0xff]
        %v291 = vld [vmem:[#allocation5 + $0x8] sm:$0xff]
        %v292 = vld [vmem:[#allocation5 + $0x10] sm:$0xff]
        %v293 = vld [vmem:[#allocation5 + $0x18] sm:$0xff]
        %v294 = vld [vmem:[%s2] sm:$0x1]
        %v296 = vlaneseq
        %v297 = vshrl.u32 %v296, 7
        %v298 = vsub.s32 0, %v297
        %v299 = vrot.slane %v294, %v298
        %vm301 = vcmask 261120
        %v303 = vsel %vm301, %v288, 0
        %v306 = vsel %vm301, %v289, 0
        %308 = vmatprep.subr.mxu0 0.0
        %309 = vmatpush1.msra.mxu0 0.0
        %310 = vmatprep.subr.mxu0 0.0
        %311 = vmatpush1.msra.mxu0 0.0
        %312 = vmatprep.subr.mxu0 0.0
        %313 = vmatpush1.msra.mxu0 0.0
        %314 = vmatprep.subr.mxu0 0.0
        %315 = vmatpush1.msra.mxu0 0.0
        %316 = vmatprep.subr.mxu0 0.0
        %317 = vmatpush1.msra.mxu0 0.0
        %318 = vmatprep.subr.mxu0 0.0
        %319 = vmatpush1.msra.mxu0 0.0
        %320 = vmatprep.subr.mxu0 0.0
        %321 = vmatpush1.msra.mxu0 0.0
        %322 = vmatprep.subr.mxu0 0.0
        %323 = vmatpush1.msra.mxu0 0.0
        %324 = vmatprep.subr.mxu0 0.0
        %325 = vmatpush1.msra.mxu0 0.0
        %326 = vmatprep.subr.mxu0 0.0
        %327 = vmatpush1.msra.mxu0 0.0
        %328 = vmatprep.subr.mxu0 0.0
        %329 = vmatpush1.msra.mxu0 0.0
        %330 = vmatprep.subr.mxu0 0.0
        %331 = vmatpush1.msra.mxu0 0.0
        %332 = vmatprep.subr.mxu0 0.0
        %333 = vmatpush1.msra.mxu0 %v293
        %334 = vmatprep.subr.mxu0 0.0
        %335 = vmatpush1.msra.mxu0 %v292
        %336 = vmatprep.subr.mxu0 0.0
        %337 = vmatpush1.msra.mxu0 %v291
        %338 = vmatprep.subr.mxu0 0.0
        %339 = vmatpush1.msra.mxu0 %v290
        %340 = vmatprep.subr.mxu0 0.0
        %341 = vmatpush2.msra.mxu0 0.0
        %342 = vmatprep.subr.mxu0 0.0
        %343 = vmatpush2.msra.mxu0 0.0
        %344 = vmatprep.subr.mxu0 0.0
        %345 = vmatpush2.msra.mxu0 0.0
        %346 = vmatprep.subr.mxu0 0.0
        %347 = vmatpush2.msra.mxu0 0.0
        %348 = vmatprep.subr.mxu0 0.0
        %349 = vmatpush2.msra.mxu0 0.0
        %350 = vmatprep.subr.mxu0 0.0
        %351 = vmatpush2.msra.mxu0 0.0
        %352 = vmatprep.subr.mxu0 0.0
        %353 = vmatpush2.msra.mxu0 0.0
        %354 = vmatprep.subr.mxu0 0.0
        %355 = vmatpush2.msra.mxu0 0.0
        %356 = vmatprep.subr.mxu0 0.0
        %357 = vmatpush2.msra.mxu0 0.0
        %358 = vmatprep.subr.mxu0 0.0
        %359 = vmatpush2.msra.mxu0 0.0
        %360 = vmatprep.subr.mxu0 0.0
        %361 = vmatpush2.msra.mxu0 0.0
        %362 = vmatprep.subr.mxu0 0.0
        %363 = vmatpush2.msra.mxu0 0.0
        %364 = vmatprep.subr.mxu0 0.0
        %365 = vmatpush2.msra.mxu0 0.0
        %366 = vmatprep.subr.mxu0 0.0
        %367 = vmatpush2.msra.mxu0 0.0
        %368 = vmatprep.subr.mxu0 0.0
        %369 = vmatpush2.msra.mxu0 0.0
        %370 = vmatprep.subr.mxu0 0.0
        %371 = vmatpush2.msra.mxu0 0.0
        %372 = vmatprep.mubr.f32.mxu0 0.0
        %373 = vmatmul.mubr.f32.gmra.mxu0 %v303
        %v374 = vpop.f32.mrf.mxu0
        %v375 = vadd.f32 %v299, %v374
        %v376 = vpop.f32.mrf.mxu0
        %377 = vmatprep.mubr.f32.mxu0 0.0
        %378 = vmatmul.mubr.f32.gmra.mxu0 %v306
        %v379 = vpop.f32.mrf.mxu0
        %v380 = vadd.f32 %v299, %v379
        %v381 = vpop.f32.mrf.mxu0
        %382 = vdwg.mxu0
        %v383 = vmax.f32 %v375, 0.0
        %v384 = vmax.f32 %v380, 0.0
        %v385 = vld [vmem:[#allocation7] sm:$0xff]
        %v386 = vld [vmem:[#allocation7 + $0x8] sm:$0xff]
        %v387 = vld [vmem:[#allocation7 + $0x10] sm:$0xff]
        %v388 = vld [vmem:[#allocation7 + $0x18] sm:$0xff]
        %v389 = vld [vmem:[#allocation7 + $0x20] sm:$0xff]
        %v390 = vld [vmem:[#allocation7 + $0x28] sm:$0xff]
        %v391 = vld [vmem:[#allocation7 + $0x30] sm:$0xff]
        %v392 = vld [vmem:[#allocation7 + $0x38] sm:$0xff]
        %v393 = vld [vmem:[#allocation7 + $0x40] sm:$0xff]
        %v394 = vld [vmem:[#allocation7 + $0x48] sm:$0xff]
        %v395 = vld [vmem:[#allocation7 + $0x50] sm:$0xff]
        %v396 = vld [vmem:[#allocation7 + $0x58] sm:$0xff]
        %v397 = vld [vmem:[#allocation7 + $0x60] sm:$0xff]
        %v398 = vld [vmem:[#allocation7 + $0x68] sm:$0xff]
        %v399 = vld [vmem:[#allocation7 + $0x70] sm:$0xff]
        %v400 = vld [vmem:[#allocation7 + $0x78] sm:$0xff]
        %v401 = vld [vmem:[%s4] sm:$0x1]
        %v403 = vlaneseq
        %v404 = vshrl.u32 %v403, 7
        %v405 = vsub.s32 0, %v404
        %v406 = vrot.slane %v401, %v405
        %408 = vmatprep.subr.mxu0 0.0
        %409 = vmatpush1.msra.mxu0 %v400
        %410 = vmatprep.subr.mxu0 0.0
        %411 = vmatpush1.msra.mxu0 %v399
        %412 = vmatprep.subr.mxu0 0.0
        %413 = vmatpush1.msra.mxu0 %v398
        %414 = vmatprep.subr.mxu0 0.0
        %415 = vmatpush1.msra.mxu0 %v397
        %416 = vmatprep.subr.mxu0 0.0
        %417 = vmatpush1.msra.mxu0 %v396
        %418 = vmatprep.subr.mxu0 0.0
        %419 = vmatpush1.msra.mxu0 %v395
        %420 = vmatprep.subr.mxu0 0.0
        %421 = vmatpush1.msra.mxu0 %v394
        %422 = vmatprep.subr.mxu0 0.0
        %423 = vmatpush1.msra.mxu0 %v393
        %424 = vmatprep.subr.mxu0 0.0
        %425 = vmatpush1.msra.mxu0 %v392
        %426 = vmatprep.subr.mxu0 0.0
        %427 = vmatpush1.msra.mxu0 %v391
        %428 = vmatprep.subr.mxu0 0.0
        %429 = vmatpush1.msra.mxu0 %v390
        %430 = vmatprep.subr.mxu0 0.0
        %431 = vmatpush1.msra.mxu0 %v389
        %432 = vmatprep.subr.mxu0 0.0
        %433 = vmatpush1.msra.mxu0 %v388
        %434 = vmatprep.subr.mxu0 0.0
        %435 = vmatpush1.msra.mxu0 %v387
        %436 = vmatprep.subr.mxu0 0.0
        %437 = vmatpush1.msra.mxu0 %v386
        %438 = vmatprep.subr.mxu0 0.0
        %439 = vmatpush1.msra.mxu0 %v385
        %440 = vmatprep.subr.mxu0 0.0
        %441 = vmatpush2.msra.mxu0 0.0
        %442 = vmatprep.subr.mxu0 0.0
        %443 = vmatpush2.msra.mxu0 0.0
        %444 = vmatprep.subr.mxu0 0.0
        %445 = vmatpush2.msra.mxu0 0.0
        %446 = vmatprep.subr.mxu0 0.0
        %447 = vmatpush2.msra.mxu0 0.0
        %448 = vmatprep.subr.mxu0 0.0
        %449 = vmatpush2.msra.mxu0 0.0
        %450 = vmatprep.subr.mxu0 0.0
        %451 = vmatpush2.msra.mxu0 0.0
        %452 = vmatprep.subr.mxu0 0.0
        %453 = vmatpush2.msra.mxu0 0.0
        %454 = vmatprep.subr.mxu0 0.0
        %455 = vmatpush2.msra.mxu0 0.0
        %456 = vmatprep.subr.mxu0 0.0
        %457 = vmatpush2.msra.mxu0 0.0
        %458 = vmatprep.subr.mxu0 0.0
        %459 = vmatpush2.msra.mxu0 0.0
        %460 = vmatprep.subr.mxu0 0.0
        %461 = vmatpush2.msra.mxu0 0.0
        %462 = vmatprep.subr.mxu0 0.0
        %463 = vmatpush2.msra.mxu0 0.0
        %464 = vmatprep.subr.mxu0 0.0
        %465 = vmatpush2.msra.mxu0 0.0
        %466 = vmatprep.subr.mxu0 0.0
        %467 = vmatpush2.msra.mxu0 0.0
        %468 = vmatprep.subr.mxu0 0.0
        %469 = vmatpush2.msra.mxu0 0.0
        %470 = vmatprep.subr.mxu0 0.0
        %471 = vmatpush2.msra.mxu0 0.0
        %472 = vmatprep.mubr.f32.mxu0 0.0
        %473 = vmatmul.mubr.f32.gmra.mxu0 %v383
        %v474 = vpop.f32.mrf.mxu0
        %v475 = vadd.f32 %v406, %v474
        %v476 = vpop.f32.mrf.mxu0
        %477 = vmatprep.mubr.f32.mxu0 0.0
        %478 = vmatmul.mubr.f32.gmra.mxu0 %v384
        %v479 = vpop.f32.mrf.mxu0
        %v480 = vadd.f32 %v406, %v479
        %v481 = vpop.f32.mrf.mxu0
        %482 = vdwg.mxu0
        %483 = vst [vmem:[%s277] sm:$0xff] %v475
        %484 = vst [vmem:[%s277 + $0x8] sm:$0xff] %v480
        %s485 = sand.u32 %s141, 1
        %s486 = scalar_lea.sflag [#allocation4], %s485
        %s487 = sand.u32 %s141, 1
        %s488 = smul.addr %s487, 16
        %s489 = scalar_lea.vmem [#allocation8], %s488
        // Predicated region
        $region53: #{tpu_custom_call.1} parent=39 // pred_check
          %p490 = pneg %p151
        $region54: #{tpu_custom_call.1} parent=39 // pred_check_branch
          %492 = sbr.rel (%p490) target = $region56
        $region55: #{tpu_custom_call.1} parent=39 // pred_region
          %s493 = smul.u32 2, %s23
          %s494 = ssub.s32 3, %s493
          %p495 = scmp.lt.s32.totalorder %s494, 2
          %s496 = scalar_select %p495, %s494, 2
          %s497 = smul.u32 128, %s496
          %s499 = ssub.s32 256, %s497
          %500 = vsyncadd %s486, %s499
          %p501 = scmp.ne.s32.totalorder 0, %s497
          %s502 = smul.addr %s493, 128
          %s503 = scalar_lea.hbm %s5, %s502
          %s504 = smul.u32 8, %s496
          %s505 = sshll.u32 %s489, 4
          %s506 = int_to_ptr.vmem [resolvable:$true] %s505
          %s507 = sshll.u32 %s504, 4
          %511 = dma.vmem_to_hbm [thread:$0]  (%p501), %s506, %s507, %s503, %s486, 128, 128, 8
        $region56: #{tpu_custom_call.1} parent=39 // pred_fallthru
          _
      $region40: #{tpu_custom_call.1} parent=5 // pred_fallthru
        _
      %p512 = scmp.le.s32.totalorder 2, %s18
      // Predicated region
      $region57: #{tpu_custom_call.1} parent=5 // pred_check
        %p513 = pneg %p512
      $region58: #{tpu_custom_call.1} parent=5 // pred_check_branch
        %515 = sbr.rel (%p513) target = $region60
      $region59: #{tpu_custom_call.1} parent=5 // pred_region
        %s516 = ssub.s32 %s18, 2
        // Predicated region
        $region61: #{tpu_custom_call.1} parent=59 // pred_check
          %p517 = pneg %p157
        $region62: #{tpu_custom_call.1} parent=59 // pred_check_branch
          %519 = sbr.rel (%p517) target = $region64
        $region63: #{tpu_custom_call.1} parent=59 // pred_region
          %s520 = sand.u32 %s142, 1
          %s521 = scalar_lea.sflag [#allocation4], %s520
          %s522 = sand.u32 %s142, 1
          %s523 = smul.addr %s522, 16
          %s524 = scalar_lea.vmem [#allocation8], %s523
          %525 = dma.done %s521, 256
        $region64: #{tpu_custom_call.1} parent=59 // pred_fallthru
          _
      $region60: #{tpu_custom_call.1} parent=5 // pred_fallthru
        _
    $region6: #{tpu_custom_call.1} parent=1 // loop_footer
      %s22 = sadd.s32 1, %s18
    $region7: #{tpu_custom_call.1} parent=1 // loop_footer_branch
      %17 = sbr.rel target = $region3
    $region8: #{tpu_custom_call.1} parent=1 // loop_exit
      _
    %526 = vsyncpa [#allocation3], 1
    %s527 = scalar_lea.sflag [#allocation3], 1
    %528 = vsyncpa %s527, 1
    %529 = vsyncpa [#allocation6], 1
    %530 = vsyncpa [#allocation4], 1
    %s531 = scalar_lea.sflag [#allocation4], 1
    %532 = vsyncpa %s531, 1

</llo_original>
